<compile_context>
chip_gen: v7x
topology: tpu7x:2x2x1
jax: 0.10.0
libtpu: 0.0.40
codegen_flags: <defaults>
</compile_context>

<pallas_src>
import functools

import jax
import jax.numpy as jnp
from jax import lax
from jax.experimental import pallas as pl
from jax.experimental.pallas import tpu as pltpu


def _mha_kernel(x_ref, wqkv_ref, wo_ref, bqkv_ref, bo_ref, o_ref,
                *, num_heads: int):
    """One batch element per grid step; everything head-batched, no loops."""
    H = num_heads
    x = x_ref[0]                                     # (S, D)  bf16
    S, D = x.shape
    dh = D // H
    scale = 1.0 / float(dh) ** 0.5

    # ---- fused QKV projection (one batched MXU matmul over heads) ----------
    xb = jnp.broadcast_to(x[None, :, :], (H, S, D))  # (H, S, D) bf16
    qkv = lax.dot_general(
        xb, wqkv_ref[...],                           # (H, D, 3*dh) bf16
        (((2,), (1,)), ((0,), (0,))),
        preferred_element_type=jnp.float32)          # (H, S, 3*dh) f32
    qkv = qkv + bqkv_ref[...]                        # bias (H, 1, 3*dh) f32

    q = qkv[:, :, 0 * dh:1 * dh]                     # (H, S, dh) f32
    k = qkv[:, :, 1 * dh:2 * dh]
    v = qkv[:, :, 2 * dh:3 * dh]

    # ---- scaled dot-product attention, batched over heads ------------------
    s = lax.dot_general(
        q.astype(jnp.bfloat16), k.astype(jnp.bfloat16),
        (((2,), (2,)), ((0,), (0,))),
        preferred_element_type=jnp.float32) * scale  # (H, S, S) f32
    s = s - jnp.max(s, axis=-1, keepdims=True)
    p = jnp.exp(s)
    p = p * pl.reciprocal(jnp.sum(p, axis=-1, keepdims=True), approx=True)

    o = lax.dot_general(
        p.astype(jnp.bfloat16), v.astype(jnp.bfloat16),
        (((2,), (1,)), ((0,), (0,))),
        preferred_element_type=jnp.float32)          # (H, S, dh) f32

    # ---- output projection without concat: sum_h o[h] @ Wo[h*dh:(h+1)*dh] --
    proj = lax.dot_general(
        o.astype(jnp.bfloat16), wo_ref[...],         # (H, dh, D) bf16
        (((2,), (1,)), ((0,), (0,))),
        preferred_element_type=jnp.float32)          # (H, S, D) f32
    out = jnp.sum(proj, axis=0) + bo_ref[...]        # (S, D) f32
    o_ref[0] = out.astype(o_ref.dtype)


def multihead_attention_pallas(x, params, num_heads: int):
    """x: (B, S, D) float32. params: dict of f32 weights/biases. Returns (B, S, D)."""
    B, S, D = x.shape
    assert D % num_heads == 0
    dh = D // num_heads
    H = num_heads

    # ---- wrapper-side weight packing (pure JAX, outside the kernel) --------
    def _head_cols(w):   # (D, D) -> (H, D, dh): head h's output columns
        return w.reshape(D, H, dh).transpose(1, 0, 2)

    def _head_bias(b):   # (1, D) -> (H, 1, dh)
        return b.reshape(1, H, dh).transpose(1, 0, 2)

    w_qkv_h = jnp.concatenate(
        [_head_cols(params["wq"]), _head_cols(params["wk"]),
         _head_cols(params["wv"])], axis=-1).astype(jnp.bfloat16)   # (H, D, 3dh)
    b_qkv_h = jnp.concatenate(
        [_head_bias(params["bq"]), _head_bias(params["bk"]),
         _head_bias(params["bv"])], axis=-1).astype(jnp.float32)    # (H, 1, 3dh)
    wo_h = params["wo"].reshape(H, dh, D).astype(jnp.bfloat16)      # (H, dh, D)
    bo = params["bo"].astype(jnp.float32)                           # (1, D)

    x_bf = x.astype(jnp.bfloat16)

    kernel = functools.partial(_mha_kernel, num_heads=num_heads)

    return pl.pallas_call(
        kernel,
        out_shape=jax.ShapeDtypeStruct((B, S, D), x.dtype),
        grid_spec=pltpu.PrefetchScalarGridSpec(
            num_scalar_prefetch=0,
            grid=(B,),
            in_specs=[
                pl.BlockSpec((1, S, D), lambda b: (b, 0, 0)),          # x
                pl.BlockSpec((H, D, 3 * dh), lambda b: (0, 0, 0)),     # W_qkv (head-major)
                pl.BlockSpec((H, dh, D), lambda b: (0, 0, 0)),         # W_o   (head-major)
                pl.BlockSpec((H, 1, 3 * dh), lambda b: (0, 0, 0)),     # b_qkv
                pl.BlockSpec((1, D), lambda b: (0, 0)),                # b_o
            ],
            out_specs=pl.BlockSpec((1, S, D), lambda b: (b, 0, 0)),
        ),
        compiler_params=pltpu.CompilerParams(
            dimension_semantics=("parallel",),
            vmem_limit_bytes=32 * 1024 * 1024),
    )(x_bf, w_qkv_h, wo_h, b_qkv_h, bo)


def init_params(key, feature_dim):
    """Deterministic synthetic weights (as nn.Linear(feature_dim, feature_dim) x4)."""
    ks = jax.random.split(key, 8)
    scale = 1.0 / (feature_dim ** 0.5)

    def lin(kw, kb):
        w = jax.random.uniform(kw, (feature_dim, feature_dim), jnp.float32,
                               -scale, scale)
        b = jax.random.uniform(kb, (1, feature_dim), jnp.float32, -scale, scale)
        return w, b

    wq, bq = lin(ks[0], ks[1])
    wk, bk = lin(ks[2], ks[3])
    wv, bv = lin(ks[4], ks[5])
    wo, bo = lin(ks[6], ks[7])
    return dict(wq=wq, wk=wk, wv=wv, wo=wo, bq=bq, bk=bk, bv=bv, bo=bo)


def reference_mha(x, params, num_heads):
    B, S, D = x.shape
    dh = D // num_heads
    q = x @ params["wq"] + params["bq"]
    k = x @ params["wk"] + params["bk"]
    v = x @ params["wv"] + params["bv"]
    q = q.reshape(B, S, num_heads, dh).transpose(0, 2, 1, 3)
    k = k.reshape(B, S, num_heads, dh).transpose(0, 2, 1, 3)
    v = v.reshape(B, S, num_heads, dh).transpose(0, 2, 1, 3)
    s = jnp.einsum("bhqd,bhkd->bhqk", q, k) / (dh ** 0.5)
    p = jax.nn.softmax(s, axis=-1)
    o = jnp.einsum("bhqk,bhkd->bhqd", p, v)
    o = o.transpose(0, 2, 1, 3).reshape(B, S, D)
    return o @ params["wo"] + params["bo"]


if __name__ == "__main__":
    B, S, D, H = 2, 8, 32, 4            # batch, seq, feature_dim, num_heads
    key = jax.random.PRNGKey(0)
    kx, kp = jax.random.split(key)
    x = jax.random.normal(kx, (B, S, D), jnp.float32)
    params = init_params(kp, D)

    out = multihead_attention_pallas(x, params, num_heads=H)
    out = jax.block_until_ready(out)

    ref = reference_mha(x, params, H)
    assert out.shape == (B, S, D)
    max_err = float(jnp.max(jnp.abs(out - ref)))
    # bf16 MXU operands + approx reciprocal -> looser tolerance vs f32 reference
    assert jnp.allclose(out, ref, atol=5e-2, rtol=5e-2), (
        f"mismatch vs reference (max abs err {max_err})")
    print("KERNEL_OK")
</pallas_src>

<mosaic_0001>
module attributes {stable_mosaic.version = 11 : i64} {
  func.func @_mha_kernel(%arg0: i32, %arg1: memref<1x8x32xbf16, #tpu.memory_space<vmem>>, %arg2: memref<4x32x24xbf16, #tpu.memory_space<vmem>>, %arg3: memref<4x8x32xbf16, #tpu.memory_space<vmem>>, %arg4: memref<4x1x24xf32, #tpu.memory_space<vmem>>, %arg5: memref<1x32xf32, #tpu.memory_space<vmem>>, %arg6: memref<1x8x32xf32, #tpu.memory_space<vmem>>) attributes {dimension_semantics = [#tpu.dimension_semantics<parallel>], iteration_bounds = array<i64: 2>, scalar_prefetch = 0 : i64, scratch_operands = 0 : i64, tpu.core_type = #tpu.core_type<tc>, window_params = [{transform_indices = @transform_0, window_bounds = array<i64: 1, 8, 32>}, {pipeline_mode = #tpu.pipeline_mode<synchronous>, transform_indices = @transform_1, window_bounds = array<i64: 4, 32, 24>}, {pipeline_mode = #tpu.pipeline_mode<synchronous>, transform_indices = @transform_2, window_bounds = array<i64: 4, 8, 32>}, {pipeline_mode = #tpu.pipeline_mode<synchronous>, transform_indices = @transform_3, window_bounds = array<i64: 4, 1, 24>}, {pipeline_mode = #tpu.pipeline_mode<synchronous>, transform_indices = @transform_4, window_bounds = array<i64: 1, 32>}, {transform_indices = @transform_5, window_bounds = array<i64: 1, 8, 32>}]} {
    %c0 = arith.constant 0 : index
    %c0_0 = arith.constant 0 : index
    %c0_1 = arith.constant 0 : index
    %0 = vector.load %arg1[%c0, %c0_0, %c0_1] : memref<1x8x32xbf16, #tpu.memory_space<vmem>>, vector<1x8x32xbf16>
    %1 = vector.shape_cast %0 : vector<1x8x32xbf16> to vector<8x32xbf16>
    %2 = vector.shape_cast %1 : vector<8x32xbf16> to vector<1x8x32xbf16>
    %3 = vector.shape_cast %2 : vector<1x8x32xbf16> to vector<1x8x32xbf16>
    %4 = vector.broadcast %3 : vector<1x8x32xbf16> to vector<4x8x32xbf16>
    %c0_2 = arith.constant 0 : index
    %c0_3 = arith.constant 0 : index
    %c0_4 = arith.constant 0 : index
    %5 = vector.load %arg2[%c0_2, %c0_3, %c0_4] : memref<4x32x24xbf16, #tpu.memory_space<vmem>>, vector<4x32x24xbf16>
    %cst = arith.constant dense<0.000000e+00> : vector<4x8x24xf32>
    %6 = tpu.matmul %4, %5, %cst {dimension_numbers = #tpu.dot_dimension_numbers<[2], [1], [1], [2], [0, 0, 0, 1, 1, 2], [0], [0]>} : vector<4x8x32xbf16>, vector<4x32x24xbf16>, vector<4x8x24xf32> -> vector<4x8x24xf32>
    %c0_5 = arith.constant 0 : index
    %c0_6 = arith.constant 0 : index
    %c0_7 = arith.constant 0 : index
    %7 = vector.load %arg4[%c0_5, %c0_6, %c0_7] : memref<4x1x24xf32, #tpu.memory_space<vmem>>, vector<4x1x24xf32>
    %8 = vector.broadcast %7 : vector<4x1x24xf32> to vector<4x8x24xf32>
    %9 = arith.addf %6, %8 : vector<4x8x24xf32>
    %10 = vector.extract_strided_slice %9 {offsets = [0, 0, 0], sizes = [4, 8, 8], strides = [1, 1, 1]} : vector<4x8x24xf32> to vector<4x8x8xf32>
    %11 = vector.extract_strided_slice %9 {offsets = [0, 0, 8], sizes = [4, 8, 8], strides = [1, 1, 1]} : vector<4x8x24xf32> to vector<4x8x8xf32>
    %12 = vector.extract_strided_slice %9 {offsets = [0, 0, 16], sizes = [4, 8, 8], strides = [1, 1, 1]} : vector<4x8x24xf32> to vector<4x8x8xf32>
    %13 = arith.truncf %10 : vector<4x8x8xf32> to vector<4x8x8xbf16>
    %14 = arith.truncf %11 : vector<4x8x8xf32> to vector<4x8x8xbf16>
    %cst_8 = arith.constant dense<0.000000e+00> : vector<4x8x8xf32>
    %15 = tpu.matmul %13, %14, %cst_8 {dimension_numbers = #tpu.dot_dimension_numbers<[2], [2], [1], [1], [0, 0, 0, 1, 1, 1], [0], [0]>} : vector<4x8x8xbf16>, vector<4x8x8xbf16>, vector<4x8x8xf32> -> vector<4x8x8xf32>
    %cst_9 = arith.constant 0.353553385 : f32
    %16 = vector.broadcast %cst_9 : f32 to vector<4x8x8xf32>
    %17 = arith.mulf %15, %16 : vector<4x8x8xf32>
    %cst_10 = arith.constant dense<0xFF800000> : vector<4x8xf32>
    %18 = vector.multi_reduction <maximumf>, %17, %cst_10 [2] : vector<4x8x8xf32> to vector<4x8xf32>
    %19 = vector.shape_cast %18 : vector<4x8xf32> to vector<4x8x1xf32>
    %20 = vector.broadcast %19 : vector<4x8x1xf32> to vector<4x8x8xf32>
    %21 = arith.subf %17, %20 : vector<4x8x8xf32>
    %22 = math.exp %21 : vector<4x8x8xf32>
    %cst_11 = arith.constant dense<0.000000e+00> : vector<4x8xf32>
    %23 = vector.multi_reduction <add>, %22, %cst_11 [2] : vector<4x8x8xf32> to vector<4x8xf32>
    %24 = vector.shape_cast %23 : vector<4x8xf32> to vector<4x8x1xf32>
    %25 = tpu.reciprocal %24 {approx = true} : vector<4x8x1xf32> -> vector<4x8x1xf32>
    %26 = vector.broadcast %25 : vector<4x8x1xf32> to vector<4x8x8xf32>
    %27 = arith.mulf %22, %26 : vector<4x8x8xf32>
    %28 = arith.truncf %27 : vector<4x8x8xf32> to vector<4x8x8xbf16>
    %29 = arith.truncf %12 : vector<4x8x8xf32> to vector<4x8x8xbf16>
    %cst_12 = arith.constant dense<0.000000e+00> : vector<4x8x8xf32>
    %30 = tpu.matmul %28, %29, %cst_12 {dimension_numbers = #tpu.dot_dimension_numbers<[2], [1], [1], [2], [0, 0, 0, 1, 1, 2], [0], [0]>} : vector<4x8x8xbf16>, vector<4x8x8xbf16>, vector<4x8x8xf32> -> vector<4x8x8xf32>
    %31 = arith.truncf %30 : vector<4x8x8xf32> to vector<4x8x8xbf16>
    %c0_13 = arith.constant 0 : index
    %c0_14 = arith.constant 0 : index
    %c0_15 = arith.constant 0 : index
    %32 = vector.load %arg3[%c0_13, %c0_14, %c0_15] : memref<4x8x32xbf16, #tpu.memory_space<vmem>>, vector<4x8x32xbf16>
    %cst_16 = arith.constant dense<0.000000e+00> : vector<4x8x32xf32>
    %33 = tpu.matmul %31, %32, %cst_16 {dimension_numbers = #tpu.dot_dimension_numbers<[2], [1], [1], [2], [0, 0, 0, 1, 1, 2], [0], [0]>} : vector<4x8x8xbf16>, vector<4x8x32xbf16>, vector<4x8x32xf32> -> vector<4x8x32xf32>
    %cst_17 = arith.constant dense<0.000000e+00> : vector<8x32xf32>
    %34 = vector.multi_reduction <add>, %33, %cst_17 [0] : vector<4x8x32xf32> to vector<8x32xf32>
    %c0_18 = arith.constant 0 : index
    %c0_19 = arith.constant 0 : index
    %35 = vector.load %arg5[%c0_18, %c0_19] : memref<1x32xf32, #tpu.memory_space<vmem>>, vector<1x32xf32>
    %36 = vector.broadcast %35 : vector<1x32xf32> to vector<8x32xf32>
    %37 = arith.addf %34, %36 : vector<8x32xf32>
    %c0_20 = arith.constant 0 : index
    %c0_21 = arith.constant 0 : index
    %c0_22 = arith.constant 0 : index
    %38 = vector.load %arg6[%c0_20, %c0_21, %c0_22] : memref<1x8x32xf32, #tpu.memory_space<vmem>>, vector<1x8x32xf32>
    %39 = vector.shape_cast %38 : vector<1x8x32xf32> to vector<8x32xf32>
    %40 = vector.shape_cast %37 : vector<8x32xf32> to vector<1x8x32xf32>
    tpu.vector_store %arg6[%c0_20, %c0_21, %c0_22], %40 {strides = array<i32>} : memref<1x8x32xf32, #tpu.memory_space<vmem>>, vector<1x8x32xf32>,
    return
  }
  func.func @transform_0(%arg0: i32) -> (i32, i32, i32) {
    %c0_i32 = arith.constant 0 : i32
    %c0_i32_0 = arith.constant 0 : i32
    %c0_i32_1 = arith.constant 0 : i32
    return %arg0, %c0_i32, %c0_i32_0 : i32, i32, i32
  }
  func.func @transform_1(%arg0: i32) -> (i32, i32, i32) {
    %c0_i32 = arith.constant 0 : i32
    %c0_i32_0 = arith.constant 0 : i32
    %c0_i32_1 = arith.constant 0 : i32
    %c0_i32_2 = arith.constant 0 : i32
    return %c0_i32, %c0_i32_0, %c0_i32_1 : i32, i32, i32
  }
  func.func @transform_2(%arg0: i32) -> (i32, i32, i32) {
    %c0_i32 = arith.constant 0 : i32
    %c0_i32_0 = arith.constant 0 : i32
    %c0_i32_1 = arith.constant 0 : i32
    %c0_i32_2 = arith.constant 0 : i32
    return %c0_i32, %c0_i32_0, %c0_i32_1 : i32, i32, i32
  }
  func.func @transform_3(%arg0: i32) -> (i32, i32, i32) {
    %c0_i32 = arith.constant 0 : i32
    %c0_i32_0 = arith.constant 0 : i32
    %c0_i32_1 = arith.constant 0 : i32
    %c0_i32_2 = arith.constant 0 : i32
    return %c0_i32, %c0_i32_0, %c0_i32_1 : i32, i32, i32
  }
  func.func @transform_4(%arg0: i32) -> (i32, i32) {
    %c0_i32 = arith.constant 0 : i32
    %c0_i32_0 = arith.constant 0 : i32
    %c0_i32_1 = arith.constant 0 : i32
    return %c0_i32, %c0_i32_0 : i32, i32
  }
  func.func @transform_5(%arg0: i32) -> (i32, i32, i32) {
    %c0_i32 = arith.constant 0 : i32
    %c0_i32_0 = arith.constant 0 : i32
    %c0_i32_1 = arith.constant 0 : i32
    return %arg0, %c0_i32, %c0_i32_0 : i32, i32, i32
  }
}

</mosaic_0001>

<llo_original>
// kernel: tpu_custom_call.1
$region0: #{tpu_custom_call.1}
  #allocation0 [shape = 'u32[]', space=smem, size = 0x4, offset = 0x4, fixed_abs, tag = 'smem constant byte address 0x4 - core index']
  #allocation1 [shape = 'u32[144,128]{1,0:T(1,128)}', space=vmem, size = 0x12000, scoped, tag = 'internal scratch']
  %s0 = inlined_call_operand.vmem [shape: bf16[2,8,32], index: 0, kind: input, shape index: {}]
  %s1 = inlined_call_operand.vmem [shape: bf16[4,32,24], index: 1, kind: input, shape index: {}]
  %s2 = inlined_call_operand.vmem [shape: bf16[4,8,32], index: 2, kind: input, shape index: {}]
  %s3 = inlined_call_operand.vmem [shape: f32[4,1,24], index: 3, kind: input, shape index: {}]
  %s4 = inlined_call_operand.vmem [shape: f32[1,32], index: 4, kind: input, shape index: {}]
  %s5 = inlined_call_operand.hbm [shape: f32[2,8,32], index: 5, kind: output, shape index: {}]
  %s6 = sld [smem:[#allocation0]]
  $region53: #{tpu_custom_call.1} parent=0
    _
  %s8 = ssub.s32 1, %s6
  %s9 = scalar_select 0, %s8, %s6
  $region1: #{tpu_custom_call.1} parent=0
    #allocation2 [shape = 'u8[8192]{0}', space=vmem, size = 0x2000, scoped, tag = 'output window, operand 0']
    #allocation3 [shape = 's32[2]{0}', space=sflag, size = 0x8, scoped, tag = 'scoped memory for tpu_custom_call.1']
    %10 = vsyncpa [#allocation3], 0
    %s11 = scalar_lea.sflag [#allocation3], 1
    %12 = vsyncpa %s11, 0
    loop: start=0, step=1, limit=4
    $region2: #{tpu_custom_call.1} parent=1 // loop_pre_header
      _
    $region3: #{tpu_custom_call.1} parent=1 // loop_header
      %s14 = sphi 0, %s18
      %p15 = scmp.ge.s32.totalorder %s14, 4
      %s24 = sphi 0, %s26
      %s27 = sphi 0, %s24
      %s28 = sphi 0, %s27
      %s44 = sphi 0, %s28
      %s48 = sphi 0, %s48
      %s50 = sphi 0, %s48
      %s51 = sphi 0, %s50
      %s65 = sphi 0, %s51
      %s69 = sphi 0, %s69
      %s71 = sphi 0, %s69
      %s72 = sphi 0, %s71
      %s86 = sphi 0, %s72
      %s90 = sphi 0, %s90
      %s92 = sphi 0, %s90
      %s93 = sphi 0, %s92
      %s107 = sphi 0, %s93
      %s111 = sphi 0, %s111
      %s113 = sphi 0, %s111
      %s114 = sphi 0, %s113
      %s128 = sphi 0, %s114
      %s134 = sphi 0, %s136
      %s137 = sphi 0, %s134
      %s138 = sphi 0, %s137
      %s154 = sphi 0, %s138
    $region4: #{tpu_custom_call.1} parent=1 // loop_header_branch
      %17 = sbr.rel (%p15) target = $region8
    $region5: #{tpu_custom_call.1} parent=1 // loop_body
      %s19 = ssub.s32 %s14, 1
      %s20 = ssub.s32 %s14, 2
      %s21 = sadd.s32 %s14, 1
      %s22 = ssub.s32 %s14, %s21
      %p23 = scmp.eq.s32.totalorder %s22, 0
      %s25 = sadd.s32 %s24, 1
      %s26 = scalar_select %p23, %s24, %s25
      %p29 = pneg %p23
      %p30 = scmp.eq.s32.totalorder %s14, 1
      %p31 = por %p29, %p30
      %p32 = scmp.ne.s32.totalorder %s24, %s27
      %p33 = scmp.eq.s32.totalorder %s14, 0
      %p34 = por %p32, %p33
      %p35 = scmp.ne.s32.totalorder %s24, %s27
      %p36 = scmp.eq.s32.totalorder %s19, 1
      %p37 = por %p35, %p36
      %p38 = scmp.ne.s32.totalorder %s27, %s28
      %p39 = scmp.eq.s32.totalorder %s19, 0
      %p40 = por %p38, %p39
      %p41 = scmp.ne.s32.totalorder %s27, %s28
      %p42 = scmp.eq.s32.totalorder %s20, 1
      %p43 = por %p41, %p42
      %p45 = scmp.ne.s32.totalorder %s28, %s44
      %p46 = scmp.eq.s32.totalorder %s20, 0
      %p47 = por %p45, %p46
      %s49 = sadd.s32 %s48, 1
      %p52 = scmp.eq.s32.totalorder %s14, 1
      %p53 = scmp.ne.s32.totalorder %s48, %s50
      %p54 = scmp.eq.s32.totalorder %s14, 0
      %p55 = por %p53, %p54
      %p56 = scmp.ne.s32.totalorder %s48, %s50
      %p57 = scmp.eq.s32.totalorder %s19, 1
      %p58 = por %p56, %p57
      %p59 = scmp.ne.s32.totalorder %s50, %s51
      %p60 = scmp.eq.s32.totalorder %s19, 0
      %p61 = por %p59, %p60
      %p62 = scmp.ne.s32.totalorder %s50, %s51
      %p63 = scmp.eq.s32.totalorder %s20, 1
      %p64 = por %p62, %p63
      %p66 = scmp.ne.s32.totalorder %s51, %s65
      %p67 = scmp.eq.s32.totalorder %s20, 0
      %p68 = por %p66, %p67
      %s70 = sadd.s32 %s69, 1
      %p73 = scmp.eq.s32.totalorder %s14, 1
      %p74 = scmp.ne.s32.totalorder %s69, %s71
      %p75 = scmp.eq.s32.totalorder %s14, 0
      %p76 = por %p74, %p75
      %p77 = scmp.ne.s32.totalorder %s69, %s71
      %p78 = scmp.eq.s32.totalorder %s19, 1
      %p79 = por %p77, %p78
      %p80 = scmp.ne.s32.totalorder %s71, %s72
      %p81 = scmp.eq.s32.totalorder %s19, 0
      %p82 = por %p80, %p81
      %p83 = scmp.ne.s32.totalorder %s71, %s72
      %p84 = scmp.eq.s32.totalorder %s20, 1
      %p85 = por %p83, %p84
      %p87 = scmp.ne.s32.totalorder %s72, %s86
      %p88 = scmp.eq.s32.totalorder %s20, 0
      %p89 = por %p87, %p88
      %s91 = sadd.s32 %s90, 1
      %p94 = scmp.eq.s32.totalorder %s14, 1
      %p95 = scmp.ne.s32.totalorder %s90, %s92
      %p96 = scmp.eq.s32.totalorder %s14, 0
      %p97 = por %p95, %p96
      %p98 = scmp.ne.s32.totalorder %s90, %s92
      %p99 = scmp.eq.s32.totalorder %s19, 1
      %p100 = por %p98, %p99
      %p101 = scmp.ne.s32.totalorder %s92, %s93
      %p102 = scmp.eq.s32.totalorder %s19, 0
      %p103 = por %p101, %p102
      %p104 = scmp.ne.s32.totalorder %s92, %s93
      %p105 = scmp.eq.s32.totalorder %s20, 1
      %p106 = por %p104, %p105
      %p108 = scmp.ne.s32.totalorder %s93, %s107
      %p109 = scmp.eq.s32.totalorder %s20, 0
      %p110 = por %p108, %p109
      %s112 = sadd.s32 %s111, 1
      %p115 = scmp.eq.s32.totalorder %s14, 1
      %p116 = scmp.ne.s32.totalorder %s111, %s113
      %p117 = scmp.eq.s32.totalorder %s14, 0
      %p118 = por %p116, %p117
      %p119 = scmp.ne.s32.totalorder %s111, %s113
      %p120 = scmp.eq.s32.totalorder %s19, 1
      %p121 = por %p119, %p120
      %p122 = scmp.ne.s32.totalorder %s113, %s114
      %p123 = scmp.eq.s32.totalorder %s19, 0
      %p124 = por %p122, %p123
      %p125 = scmp.ne.s32.totalorder %s113, %s114
      %p126 = scmp.eq.s32.totalorder %s20, 1
      %p127 = por %p125, %p126
      %p129 = scmp.ne.s32.totalorder %s114, %s128
      %p130 = scmp.eq.s32.totalorder %s20, 0
      %p131 = por %p129, %p130
      %s132 = ssub.s32 %s14, %s21
      %p133 = scmp.eq.s32.totalorder %s132, 0
      %s135 = sadd.s32 %s134, 1
      %s136 = scalar_select %p133, %s134, %s135
      %p139 = pneg %p133
      %p140 = scmp.eq.s32.totalorder %s14, 1
      %p141 = por %p139, %p140
      %p142 = scmp.ne.s32.totalorder %s134, %s137
      %p143 = scmp.eq.s32.totalorder %s14, 0
      %p144 = por %p142, %p143
      %p145 = scmp.ne.s32.totalorder %s134, %s137
      %p146 = scmp.eq.s32.totalorder %s19, 1
      %p147 = por %p145, %p146
      %p148 = scmp.ne.s32.totalorder %s137, %s138
      %p149 = scmp.eq.s32.totalorder %s19, 0
      %p150 = por %p148, %p149
      %p151 = scmp.ne.s32.totalorder %s137, %s138
      %p152 = scmp.eq.s32.totalorder %s20, 1
      %p153 = por %p151, %p152
      %p155 = scmp.ne.s32.totalorder %s138, %s154
      %p156 = scmp.eq.s32.totalorder %s20, 0
      %p157 = por %p155, %p156
      %p158 = scmp.le.s32.totalorder 1, %s14
      %p159 = scmp.lt.s32.totalorder %s14, 3
      %p160 = pnand %p158, %p159
      %p161 = pneg %p160
      // Predicated region
      $region9: #{tpu_custom_call.1} parent=5 // pred_check
        _
      $region10: #{tpu_custom_call.1} parent=5 // pred_check_branch
        %163 = sbr.rel (%p160) target = $region12
      $region11: #{tpu_custom_call.1} parent=5 // pred_region
        %s164 = ssub.s32 %s14, 1
        // Predicated region
        $region13: #{tpu_custom_call.1} parent=11 // pred_check
          %p165 = pneg %p61
        $region14: #{tpu_custom_call.1} parent=11 // pred_check_branch
          %167 = sbr.rel (%p165) target = $region16
        $region15: #{tpu_custom_call.1} parent=11 // pred_region
          _
        $region16: #{tpu_custom_call.1} parent=11 // pred_fallthru
          _
        // Predicated region
        $region17: #{tpu_custom_call.1} parent=11 // pred_check
          %p168 = pneg %p82
        $region18: #{tpu_custom_call.1} parent=11 // pred_check_branch
          %170 = sbr.rel (%p168) target = $region20
        $region19: #{tpu_custom_call.1} parent=11 // pred_region
          _
        $region20: #{tpu_custom_call.1} parent=11 // pred_fallthru
          _
        // Predicated region
        $region21: #{tpu_custom_call.1} parent=11 // pred_check
          %p171 = pneg %p103
        $region22: #{tpu_custom_call.1} parent=11 // pred_check_branch
          %173 = sbr.rel (%p171) target = $region24
        $region23: #{tpu_custom_call.1} parent=11 // pred_region
          _
        $region24: #{tpu_custom_call.1} parent=11 // pred_fallthru
          _
        // Predicated region
        $region25: #{tpu_custom_call.1} parent=11 // pred_check
          %p174 = pneg %p124
        $region26: #{tpu_custom_call.1} parent=11 // pred_check_branch
          %176 = sbr.rel (%p174) target = $region28
        $region27: #{tpu_custom_call.1} parent=11 // pred_region
          _
        $region28: #{tpu_custom_call.1} parent=11 // pred_fallthru
          _
      $region12: #{tpu_custom_call.1} parent=5 // pred_fallthru
        _
      %p177 = scmp.lt.s32.totalorder %s14, 2
      // Predicated region
      $region29: #{tpu_custom_call.1} parent=5 // pred_check
        %p178 = pneg %p177
      $region30: #{tpu_custom_call.1} parent=5 // pred_check_branch
        %180 = sbr.rel (%p178) target = $region32
      $region31: #{tpu_custom_call.1} parent=5 // pred_region
        // Predicated region
        $region33: #{tpu_custom_call.1} parent=31 // pred_check
          %p181 = pneg %p34
        $region34: #{tpu_custom_call.1} parent=31 // pred_check_branch
          %183 = sbr.rel (%p181) target = $region36
        $region35: #{tpu_custom_call.1} parent=31 // pred_region
          %p184 = scmp.lt.s32.totalorder %s14, 1
          %s185 = scalar_select %p184, %s14, 1
          %s186 = smul.addr %s185, 4
          %s187 = scalar_lea.vmem %s0, %s186
        $region36: #{tpu_custom_call.1} parent=31 // pred_fallthru
          _
      $region32: #{tpu_custom_call.1} parent=5 // pred_fallthru
        _
      %p188 = scmp.le.s32.totalorder 1, %s14
      %p189 = scmp.lt.s32.totalorder %s14, 3
      %p190 = pnand %p188, %p189
      %p191 = pneg %p190
      // Predicated region
      $region37: #{tpu_custom_call.1} parent=5 // pred_check
        _
      $region38: #{tpu_custom_call.1} parent=5 // pred_check_branch
        %193 = sbr.rel (%p190) target = $region40
      $region39: #{tpu_custom_call.1} parent=5 // pred_region
        %s194 = ssub.s32 %s14, 1
        %p195 = scmp.lt.s32.totalorder %s19, 1
        %s196 = scalar_select %p195, %s19, 1
        %s197 = smul.addr %s196, 4
        %s198 = scalar_lea.vmem %s0, %s197
        %p199 = pneg %p40
        %p200 = pneg %p37
        %p201 = pneg %p61
        %p202 = pneg %p58
        %p203 = pneg %p82
        %p204 = pneg %p79
        %p205 = pneg %p103
        %p206 = pneg %p100
        %p207 = pneg %p124
        %p208 = pneg %p121
        %p209 = pneg %p150
        %p210 = pneg %p147
        %s211 = sand.u32 %s137, 1
        %s212 = scalar_lea.sflag [#allocation3], %s211
        %s213 = sand.u32 %s137, 1
        %s214 = smul.addr %s213, 8
        %s215 = scalar_lea.vmem [#allocation2], %s214
        %p216 = scmp.lt.s32.totalorder %s19, 1
        %s217 = scalar_select %p216, %s19, 1
        %s218 = smul.addr %s217, 4
        %s219 = scalar_lea.vmem %s0, %s218
        %v221 = vld [vmem:[%s219] sm:$0xf]
        %v222 = vld [vmem:[%s1] sm:$0xf]
        %v223 = vld [vmem:[%s1 + $0x4] sm:$0xf]
        %v224 = vld [vmem:[%s1 + $0x8] sm:$0xf]
        %v225 = vld [vmem:[%s1 + $0xc] sm:$0xf]
        %v226 = vld [vmem:[%s1 + $0x10] sm:$0xf]
        %v227 = vld [vmem:[%s1 + $0x14] sm:$0xf]
        %v228 = vld [vmem:[%s1 + $0x18] sm:$0xf]
        %v229 = vld [vmem:[%s1 + $0x1c] sm:$0xf]
        %v230 = vld [vmem:[%s1 + $0x20] sm:$0xf]
        %v231 = vld [vmem:[%s1 + $0x24] sm:$0xf]
        %v232 = vld [vmem:[%s1 + $0x28] sm:$0xf]
        %v233 = vld [vmem:[%s1 + $0x2c] sm:$0xf]
        %v234 = vld [vmem:[%s1 + $0x30] sm:$0xf]
        %v235 = vld [vmem:[%s1 + $0x34] sm:$0xf]
        %v236 = vld [vmem:[%s1 + $0x38] sm:$0xf]
        %v237 = vld [vmem:[%s1 + $0x3c] sm:$0xf]
        %v238 = vld [vmem:[%s3] sm:$0x1]
        %v239 = vld [vmem:[%s3 + $0x1] sm:$0x1]
        %v240 = vld [vmem:[%s3 + $0x2] sm:$0x1]
        %v241 = vld [vmem:[%s3 + $0x3] sm:$0x1]
        %v246 = vlaneseq
        %v247 = vshrl.u32 %v246, 7
        %v248 = vsub.s32 0, %v247
        %v249 = vrot.slane %v238, %v248
        %v250 = vlaneseq
        %v251 = vshrl.u32 %v250, 7
        %v252 = vsub.s32 0, %v251
        %v253 = vrot.slane %v239, %v252
        %v254 = vlaneseq
        %v255 = vshrl.u32 %v254, 7
        %v256 = vsub.s32 0, %v255
        %v257 = vrot.slane %v240, %v256
        %v258 = vlaneseq
        %v259 = vshrl.u32 %v258, 7
        %v260 = vsub.s32 0, %v259
        %v261 = vrot.slane %v241, %v260
        %v270 = vunpack.c.l.b16 %v222
        %v271 = vunpack.c.l.b16 %v223
        %v272 = vunpack.c.l.b16 %v224
        %v273 = vunpack.c.l.b16 %v225
        %v274 = vpack.c.b16 %v271, %v270
        %v275 = vpack.c.b16 %v273, %v272
        %vm278 = vcmask 261120
        %v280 = vsel %vm278, %v221, 0
        %282 = vmatprep.subr.bf16.mxu0 0
        %283 = vmatpush1.bf16.msra.mxu0 %v274
        %284 = vmatprep.subr.bf16.mxu0 0
        %285 = vmatpush1.bf16.msra.mxu0 %v275
        %286 = vmatprep.subr.bf16.mxu0 0
        %287 = vmatpush1.bf16.msra.mxu0 0
        %288 = vmatprep.subr.bf16.mxu0 0
        %289 = vmatpush1.bf16.msra.mxu0 0
        %290 = vmatprep.subr.bf16.mxu0 0
        %291 = vmatpush1.bf16.msra.mxu0 0
        %292 = vmatprep.subr.bf16.mxu0 0
        %293 = vmatpush1.bf16.msra.mxu0 0
        %294 = vmatprep.subr.bf16.mxu0 0
        %295 = vmatpush1.bf16.msra.mxu0 0
        %296 = vmatprep.subr.bf16.mxu0 0
        %297 = vmatpush1.bf16.msra.mxu0 0
        %298 = vmatprep.subr.bf16.mxu0 0
        %299 = vmatpush1.bf16.msra.mxu0 0
        %300 = vmatprep.subr.bf16.mxu0 0
        %301 = vmatpush1.bf16.msra.mxu0 0
        %302 = vmatprep.subr.bf16.mxu0 0
        %303 = vmatpush1.bf16.msra.mxu0 0
        %304 = vmatprep.subr.bf16.mxu0 0
        %305 = vmatpush1.bf16.msra.mxu0 0
        %306 = vmatprep.subr.bf16.mxu0 0
        %307 = vmatpush1.bf16.msra.mxu0 0
        %308 = vmatprep.subr.bf16.mxu0 0
        %309 = vmatpush1.bf16.msra.mxu0 0
        %310 = vmatprep.subr.bf16.mxu0 0
        %311 = vmatpush1.bf16.msra.mxu0 0
        %312 = vmatprep.subr.bf16.mxu0 0
        %313 = vmatpush1.bf16.msra.mxu0 0
        %314 = vmatprep.mubr.bf16.mxu0 0
        %315 = vmatmul.mubr.bf16.gmra.mrb[0].mxu0 %v280
        %v316 = vpop.f32.mrb[0].mxu0
        %v317 = vadd.f32 %v249, %v316
        %v318 = vpop.f32.mrb[0].mxu0
        %v319 = vpop.f32.mrb[0].mxu0
        %v320 = vpop.f32.mrb[0].mxu0
        %321 = vdwg.mxu0
        %v326 = vunpack.c.l.b16 %v226
        %v327 = vunpack.c.l.b16 %v227
        %v328 = vunpack.c.l.b16 %v228
        %v329 = vunpack.c.l.b16 %v229
        %v330 = vpack.c.b16 %v327, %v326
        %v331 = vpack.c.b16 %v329, %v328
        %334 = vmatprep.subr.bf16.mxu0 0
        %335 = vmatpush1.bf16.msra.mxu0 %v330
        %336 = vmatprep.subr.bf16.mxu0 0
        %337 = vmatpush1.bf16.msra.mxu0 %v331
        %338 = vmatprep.subr.bf16.mxu0 0
        %339 = vmatpush1.bf16.msra.mxu0 0
        %340 = vmatprep.subr.bf16.mxu0 0
        %341 = vmatpush1.bf16.msra.mxu0 0
        %342 = vmatprep.subr.bf16.mxu0 0
        %343 = vmatpush1.bf16.msra.mxu0 0
        %344 = vmatprep.subr.bf16.mxu0 0
        %345 = vmatpush1.bf16.msra.mxu0 0
        %346 = vmatprep.subr.bf16.mxu0 0
        %347 = vmatpush1.bf16.msra.mxu0 0
        %348 = vmatprep.subr.bf16.mxu0 0
        %349 = vmatpush1.bf16.msra.mxu0 0
        %350 = vmatprep.subr.bf16.mxu0 0
        %351 = vmatpush1.bf16.msra.mxu0 0
        %352 = vmatprep.subr.bf16.mxu0 0
        %353 = vmatpush1.bf16.msra.mxu0 0
        %354 = vmatprep.subr.bf16.mxu0 0
        %355 = vmatpush1.bf16.msra.mxu0 0
        %356 = vmatprep.subr.bf16.mxu0 0
        %357 = vmatpush1.bf16.msra.mxu0 0
        %358 = vmatprep.subr.bf16.mxu0 0
        %359 = vmatpush1.bf16.msra.mxu0 0
        %360 = vmatprep.subr.bf16.mxu0 0
        %361 = vmatpush1.bf16.msra.mxu0 0
        %362 = vmatprep.subr.bf16.mxu0 0
        %363 = vmatpush1.bf16.msra.mxu0 0
        %364 = vmatprep.subr.bf16.mxu0 0
        %365 = vmatpush1.bf16.msra.mxu0 0
        %366 = vmatprep.mubr.bf16.mxu0 0
        %367 = vmatmul.mubr.bf16.gmra.mrb[0].mxu0 %v280
        %v368 = vpop.f32.mrb[0].mxu0
        %v369 = vadd.f32 %v253, %v368
        %v370 = vpop.f32.mrb[0].mxu0
        %v371 = vpop.f32.mrb[0].mxu0
        %v372 = vpop.f32.mrb[0].mxu0
        %373 = vdwg.mxu0
        %v378 = vunpack.c.l.b16 %v230
        %v379 = vunpack.c.l.b16 %v231
        %v380 = vunpack.c.l.b16 %v232
        %v381 = vunpack.c.l.b16 %v233
        %v382 = vpack.c.b16 %v379, %v378
        %v383 = vpack.c.b16 %v381, %v380
        %386 = vmatprep.subr.bf16.mxu0 0
        %387 = vmatpush1.bf16.msra.mxu0 %v382
        %388 = vmatprep.subr.bf16.mxu0 0
        %389 = vmatpush1.bf16.msra.mxu0 %v383
        %390 = vmatprep.subr.bf16.mxu0 0
        %391 = vmatpush1.bf16.msra.mxu0 0
        %392 = vmatprep.subr.bf16.mxu0 0
        %393 = vmatpush1.bf16.msra.mxu0 0
        %394 = vmatprep.subr.bf16.mxu0 0
        %395 = vmatpush1.bf16.msra.mxu0 0
        %396 = vmatprep.subr.bf16.mxu0 0
        %397 = vmatpush1.bf16.msra.mxu0 0
        %398 = vmatprep.subr.bf16.mxu0 0
        %399 = vmatpush1.bf16.msra.mxu0 0
        %400 = vmatprep.subr.bf16.mxu0 0
        %401 = vmatpush1.bf16.msra.mxu0 0
        %402 = vmatprep.subr.bf16.mxu0 0
        %403 = vmatpush1.bf16.msra.mxu0 0
        %404 = vmatprep.subr.bf16.mxu0 0
        %405 = vmatpush1.bf16.msra.mxu0 0
        %406 = vmatprep.subr.bf16.mxu0 0
        %407 = vmatpush1.bf16.msra.mxu0 0
        %408 = vmatprep.subr.bf16.mxu0 0
        %409 = vmatpush1.bf16.msra.mxu0 0
        %410 = vmatprep.subr.bf16.mxu0 0
        %411 = vmatpush1.bf16.msra.mxu0 0
        %412 = vmatprep.subr.bf16.mxu0 0
        %413 = vmatpush1.bf16.msra.mxu0 0
        %414 = vmatprep.subr.bf16.mxu0 0
        %415 = vmatpush1.bf16.msra.mxu0 0
        %416 = vmatprep.subr.bf16.mxu0 0
        %417 = vmatpush1.bf16.msra.mxu0 0
        %418 = vmatprep.mubr.bf16.mxu0 0
        %419 = vmatmul.mubr.bf16.gmra.mrb[0].mxu0 %v280
        %v420 = vpop.f32.mrb[0].mxu0
        %v421 = vadd.f32 %v257, %v420
        %v422 = vpop.f32.mrb[0].mxu0
        %v423 = vpop.f32.mrb[0].mxu0
        %v424 = vpop.f32.mrb[0].mxu0
        %425 = vdwg.mxu0
        %v430 = vunpack.c.l.b16 %v234
        %v431 = vunpack.c.l.b16 %v235
        %v432 = vunpack.c.l.b16 %v236
        %v433 = vunpack.c.l.b16 %v237
        %v434 = vpack.c.b16 %v431, %v430
        %v435 = vpack.c.b16 %v433, %v432
        %438 = vmatprep.subr.bf16.mxu0 0
        %439 = vmatpush1.bf16.msra.mxu0 %v434
        %440 = vmatprep.subr.bf16.mxu0 0
        %441 = vmatpush1.bf16.msra.mxu0 %v435
        %442 = vmatprep.subr.bf16.mxu0 0
        %443 = vmatpush1.bf16.msra.mxu0 0
        %444 = vmatprep.subr.bf16.mxu0 0
        %445 = vmatpush1.bf16.msra.mxu0 0
        %446 = vmatprep.subr.bf16.mxu0 0
        %447 = vmatpush1.bf16.msra.mxu0 0
        %448 = vmatprep.subr.bf16.mxu0 0
        %449 = vmatpush1.bf16.msra.mxu0 0
        %450 = vmatprep.subr.bf16.mxu0 0
        %451 = vmatpush1.bf16.msra.mxu0 0
        %452 = vmatprep.subr.bf16.mxu0 0
        %453 = vmatpush1.bf16.msra.mxu0 0
        %454 = vmatprep.subr.bf16.mxu0 0
        %455 = vmatpush1.bf16.msra.mxu0 0
        %456 = vmatprep.subr.bf16.mxu0 0
        %457 = vmatpush1.bf16.msra.mxu0 0
        %458 = vmatprep.subr.bf16.mxu0 0
        %459 = vmatpush1.bf16.msra.mxu0 0
        %460 = vmatprep.subr.bf16.mxu0 0
        %461 = vmatpush1.bf16.msra.mxu0 0
        %462 = vmatprep.subr.bf16.mxu0 0
        %463 = vmatpush1.bf16.msra.mxu0 0
        %464 = vmatprep.subr.bf16.mxu0 0
        %465 = vmatpush1.bf16.msra.mxu0 0
        %466 = vmatprep.subr.bf16.mxu0 0
        %467 = vmatpush1.bf16.msra.mxu0 0
        %468 = vmatprep.subr.bf16.mxu0 0
        %469 = vmatpush1.bf16.msra.mxu0 0
        %470 = vmatprep.mubr.bf16.mxu0 0
        %471 = vmatmul.mubr.bf16.gmra.mrb[0].mxu0 %v280
        %v472 = vpop.f32.mrb[0].mxu0
        %v473 = vadd.f32 %v261, %v472
        %v474 = vpop.f32.mrb[0].mxu0
        %v475 = vpop.f32.mrb[0].mxu0
        %v476 = vpop.f32.mrb[0].mxu0
        %477 = vdwg.mxu0
        %v478 = vpack.c.bf16 %v317, %v317
        %v479 = vpack.c.bf16 %v369, %v369
        %v480 = vpack.c.bf16 %v421, %v421
        %v481 = vpack.c.bf16 %v473, %v473
        %483 = vrot.lane.b32.xlu0 %v478, 120
        %v484 = vpop.permute.xlu0 %483
        %vm485 = vcmask 64512
        %v487 = vsel %vm485, %v478, 0
        %v490 = vsel %vm485, %v484, 0
        %492 = vmatprep.subr.bf16.mxu0 0
        %493 = vmatpush1.bf16.xpose.msra.mxu0 %v490
        %494 = vmatprep.subr.bf16.mxu0 0
        %495 = vmatpush1.bf16.xpose.msra.mxu0 0
        %496 = vmatprep.subr.bf16.mxu0 0
        %497 = vmatpush1.bf16.xpose.msra.mxu0 0
        %498 = vmatprep.subr.bf16.mxu0 0
        %499 = vmatpush1.bf16.xpose.msra.mxu0 0
        %500 = vmatprep.subr.bf16.mxu0 0
        %501 = vmatpush1.bf16.xpose.msra.mxu0 0
        %502 = vmatprep.subr.bf16.mxu0 0
        %503 = vmatpush1.bf16.xpose.msra.mxu0 0
        %504 = vmatprep.subr.bf16.mxu0 0
        %505 = vmatpush1.bf16.xpose.msra.mxu0 0
        %506 = vmatprep.subr.bf16.mxu0 0
        %507 = vmatpush1.bf16.xpose.msra.mxu0 0
        %508 = vmatprep.subr.bf16.mxu0 0
        %509 = vmatpush1.bf16.xpose.msra.mxu0 0
        %510 = vmatprep.subr.bf16.mxu0 0
        %511 = vmatpush1.bf16.xpose.msra.mxu0 0
        %512 = vmatprep.subr.bf16.mxu0 0
        %513 = vmatpush1.bf16.xpose.msra.mxu0 0
        %514 = vmatprep.subr.bf16.mxu0 0
        %515 = vmatpush1.bf16.xpose.msra.mxu0 0
        %516 = vmatprep.subr.bf16.mxu0 0
        %517 = vmatpush1.bf16.xpose.msra.mxu0 0
        %518 = vmatprep.subr.bf16.mxu0 0
        %519 = vmatpush1.bf16.xpose.msra.mxu0 0
        %520 = vmatprep.subr.bf16.mxu0 0
        %521 = vmatpush1.bf16.xpose.msra.mxu0 0
        %522 = vmatprep.subr.bf16.mxu0 0
        %523 = vmatpush1.bf16.xpose.msra.mxu0 0
        %524 = vmatprep.mubr.bf16.mxu0 0
        %525 = vmatmul.mubr.bf16.gmra.mrb[0].mxu0 %v487
        %v526 = vpop.f32.mrb[0].mxu0
        %v527 = vadd.f32 0.0, %v526
        %v528 = vpop.f32.mrb[0].mxu0
        %v529 = vpop.f32.mrb[0].mxu0
        %v530 = vpop.f32.mrb[0].mxu0
        %531 = vdwg.mxu0
        %533 = vrot.lane.b32.xlu0 %v479, 120
        %v534 = vpop.permute.xlu0 %533
        %v536 = vsel %vm485, %v479, 0
        %v539 = vsel %vm485, %v534, 0
        %541 = vmatprep.subr.bf16.mxu0 0
        %542 = vmatpush1.bf16.xpose.msra.mxu0 %v539
        %543 = vmatprep.subr.bf16.mxu0 0
        %544 = vmatpush1.bf16.xpose.msra.mxu0 0
        %545 = vmatprep.subr.bf16.mxu0 0
        %546 = vmatpush1.bf16.xpose.msra.mxu0 0
        %547 = vmatprep.subr.bf16.mxu0 0
        %548 = vmatpush1.bf16.xpose.msra.mxu0 0
        %549 = vmatprep.subr.bf16.mxu0 0
        %550 = vmatpush1.bf16.xpose.msra.mxu0 0
        %551 = vmatprep.subr.bf16.mxu0 0
        %552 = vmatpush1.bf16.xpose.msra.mxu0 0
        %553 = vmatprep.subr.bf16.mxu0 0
        %554 = vmatpush1.bf16.xpose.msra.mxu0 0
        %555 = vmatprep.subr.bf16.mxu0 0
        %556 = vmatpush1.bf16.xpose.msra.mxu0 0
        %557 = vmatprep.subr.bf16.mxu0 0
        %558 = vmatpush1.bf16.xpose.msra.mxu0 0
        %559 = vmatprep.subr.bf16.mxu0 0
        %560 = vmatpush1.bf16.xpose.msra.mxu0 0
        %561 = vmatprep.subr.bf16.mxu0 0
        %562 = vmatpush1.bf16.xpose.msra.mxu0 0
        %563 = vmatprep.subr.bf16.mxu0 0
        %564 = vmatpush1.bf16.xpose.msra.mxu0 0
        %565 = vmatprep.subr.bf16.mxu0 0
        %566 = vmatpush1.bf16.xpose.msra.mxu0 0
        %567 = vmatprep.subr.bf16.mxu0 0
        %568 = vmatpush1.bf16.xpose.msra.mxu0 0
        %569 = vmatprep.subr.bf16.mxu0 0
        %570 = vmatpush1.bf16.xpose.msra.mxu0 0
        %571 = vmatprep.subr.bf16.mxu0 0
        %572 = vmatpush1.bf16.xpose.msra.mxu0 0
        %573 = vmatprep.mubr.bf16.mxu0 0
        %574 = vmatmul.mubr.bf16.gmra.mrb[0].mxu0 %v536
        %v575 = vpop.f32.mrb[0].mxu0
        %v576 = vadd.f32 0.0, %v575
        %v577 = vpop.f32.mrb[0].mxu0
        %v578 = vpop.f32.mrb[0].mxu0
        %v579 = vpop.f32.mrb[0].mxu0
        %580 = vdwg.mxu0
        %582 = vrot.lane.b32.xlu0 %v480, 120
        %v583 = vpop.permute.xlu0 %582
        %v585 = vsel %vm485, %v480, 0
        %v588 = vsel %vm485, %v583, 0
        %590 = vmatprep.subr.bf16.mxu0 0
        %591 = vmatpush1.bf16.xpose.msra.mxu0 %v588
        %592 = vmatprep.subr.bf16.mxu0 0
        %593 = vmatpush1.bf16.xpose.msra.mxu0 0
        %594 = vmatprep.subr.bf16.mxu0 0
        %595 = vmatpush1.bf16.xpose.msra.mxu0 0
        %596 = vmatprep.subr.bf16.mxu0 0
        %597 = vmatpush1.bf16.xpose.msra.mxu0 0
        %598 = vmatprep.subr.bf16.mxu0 0
        %599 = vmatpush1.bf16.xpose.msra.mxu0 0
        %600 = vmatprep.subr.bf16.mxu0 0
        %601 = vmatpush1.bf16.xpose.msra.mxu0 0
        %602 = vmatprep.subr.bf16.mxu0 0
        %603 = vmatpush1.bf16.xpose.msra.mxu0 0
        %604 = vmatprep.subr.bf16.mxu0 0
        %605 = vmatpush1.bf16.xpose.msra.mxu0 0
        %606 = vmatprep.subr.bf16.mxu0 0
        %607 = vmatpush1.bf16.xpose.msra.mxu0 0
        %608 = vmatprep.subr.bf16.mxu0 0
        %609 = vmatpush1.bf16.xpose.msra.mxu0 0
        %610 = vmatprep.subr.bf16.mxu0 0
        %611 = vmatpush1.bf16.xpose.msra.mxu0 0
        %612 = vmatprep.subr.bf16.mxu0 0
        %613 = vmatpush1.bf16.xpose.msra.mxu0 0
        %614 = vmatprep.subr.bf16.mxu0 0
        %615 = vmatpush1.bf16.xpose.msra.mxu0 0
        %616 = vmatprep.subr.bf16.mxu0 0
        %617 = vmatpush1.bf16.xpose.msra.mxu0 0
        %618 = vmatprep.subr.bf16.mxu0 0
        %619 = vmatpush1.bf16.xpose.msra.mxu0 0
        %620 = vmatprep.subr.bf16.mxu0 0
        %621 = vmatpush1.bf16.xpose.msra.mxu0 0
        %622 = vmatprep.mubr.bf16.mxu0 0
        %623 = vmatmul.mubr.bf16.gmra.mrb[0].mxu0 %v585
        %v624 = vpop.f32.mrb[0].mxu0
        %v625 = vadd.f32 0.0, %v624
        %v626 = vpop.f32.mrb[0].mxu0
        %v627 = vpop.f32.mrb[0].mxu0
        %v628 = vpop.f32.mrb[0].mxu0
        %629 = vdwg.mxu0
        %631 = vrot.lane.b32.xlu0 %v481, 120
        %v632 = vpop.permute.xlu0 %631
        %v634 = vsel %vm485, %v481, 0
        %v637 = vsel %vm485, %v632, 0
        %639 = vmatprep.subr.bf16.mxu0 0
        %640 = vmatpush1.bf16.xpose.msra.mxu0 %v637
        %641 = vmatprep.subr.bf16.mxu0 0
        %642 = vmatpush1.bf16.xpose.msra.mxu0 0
        %643 = vmatprep.subr.bf16.mxu0 0
        %644 = vmatpush1.bf16.xpose.msra.mxu0 0
        %645 = vmatprep.subr.bf16.mxu0 0
        %646 = vmatpush1.bf16.xpose.msra.mxu0 0
        %647 = vmatprep.subr.bf16.mxu0 0
        %648 = vmatpush1.bf16.xpose.msra.mxu0 0
        %649 = vmatprep.subr.bf16.mxu0 0
        %650 = vmatpush1.bf16.xpose.msra.mxu0 0
        %651 = vmatprep.subr.bf16.mxu0 0
        %652 = vmatpush1.bf16.xpose.msra.mxu0 0
        %653 = vmatprep.subr.bf16.mxu0 0
        %654 = vmatpush1.bf16.xpose.msra.mxu0 0
        %655 = vmatprep.subr.bf16.mxu0 0
        %656 = vmatpush1.bf16.xpose.msra.mxu0 0
        %657 = vmatprep.subr.bf16.mxu0 0
        %658 = vmatpush1.bf16.xpose.msra.mxu0 0
        %659 = vmatprep.subr.bf16.mxu0 0
        %660 = vmatpush1.bf16.xpose.msra.mxu0 0
        %661 = vmatprep.subr.bf16.mxu0 0
        %662 = vmatpush1.bf16.xpose.msra.mxu0 0
        %663 = vmatprep.subr.bf16.mxu0 0
        %664 = vmatpush1.bf16.xpose.msra.mxu0 0
        %665 = vmatprep.subr.bf16.mxu0 0
        %666 = vmatpush1.bf16.xpose.msra.mxu0 0
        %667 = vmatprep.subr.bf16.mxu0 0
        %668 = vmatpush1.bf16.xpose.msra.mxu0 0
        %669 = vmatprep.subr.bf16.mxu0 0
        %670 = vmatpush1.bf16.xpose.msra.mxu0 0
        %671 = vmatprep.mubr.bf16.mxu0 0
        %672 = vmatmul.mubr.bf16.gmra.mrb[0].mxu0 %v634
        %v673 = vpop.f32.mrb[0].mxu0
        %v674 = vadd.f32 0.0, %v673
        %v675 = vpop.f32.mrb[0].mxu0
        %v676 = vpop.f32.mrb[0].mxu0
        %v677 = vpop.f32.mrb[0].mxu0
        %678 = vdwg.mxu0
        %v679 = vmul.f32 %v527, 0.35355338
        %v680 = vmul.f32 %v576, 0.35355338
        %v681 = vmul.f32 %v625, 0.35355338
        %v682 = vmul.f32 %v674, 0.35355338
        %v683 = vsel %vm485, %v679, -inf
        %684 = vmax.xlane.f32.xlu0 %v683
        %v685 = vpop.xlane.xlu0 %684
        %v686 = vsel %vm485, %v680, -inf
        %687 = vmax.xlane.f32.xlu0 %v686
        %v688 = vpop.xlane.xlu0 %687
        %v689 = vsel %vm485, %v681, -inf
        %690 = vmax.xlane.f32.xlu0 %v689
        %v691 = vpop.xlane.xlu0 %690
        %v692 = vsel %vm485, %v682, -inf
        %693 = vmax.xlane.f32.xlu0 %v692
        %v694 = vpop.xlane.xlu0 %693
        %v695 = vsub.f32 %v679, %v685
        %v696 = vsub.f32 %v680, %v688
        %v697 = vsub.f32 %v681, %v691
        %v698 = vsub.f32 %v682, %v694
        %v699 = vmul.f32 %v695, 1.442695
        %v700 = vpow.pop %v699
        %v701 = vmul.f32 %v696, 1.442695
        %v702 = vpow.pop %v701
        %v703 = vmul.f32 %v697, 1.442695
        %v704 = vpow.pop %v703
        %v705 = vmul.f32 %v698, 1.442695
        %v706 = vpow.pop %v705
        %v707 = vsel %vm485, %v700, 0.0
        %708 = vadd.xlane.f32.xlu0 %v707
        %v709 = vpop.xlane.xlu0 %708
        %v710 = vsel %vm485, %v702, 0.0
        %711 = vadd.xlane.f32.xlu0 %v710
        %v712 = vpop.xlane.xlu0 %711
        %v713 = vsel %vm485, %v704, 0.0
        %714 = vadd.xlane.f32.xlu0 %v713
        %v715 = vpop.xlane.xlu0 %714
        %v716 = vsel %vm485, %v706, 0.0
        %717 = vadd.xlane.f32.xlu0 %v716
        %v718 = vpop.xlane.xlu0 %717
        %v719 = vrcp.pop %v709
        %v720 = vrcp.pop %v712
        %v721 = vrcp.pop %v715
        %v722 = vrcp.pop %v718
        %v723 = vmul.f32 %v700, %v719
        %v724 = vmul.f32 %v702, %v720
        %v725 = vmul.f32 %v704, %v721
        %v726 = vmul.f32 %v706, %v722
        %v727 = vpack.c.bf16 %v723, %v723
        %v728 = vpack.c.bf16 %v724, %v724
        %v729 = vpack.c.bf16 %v725, %v725
        %v730 = vpack.c.bf16 %v726, %v726
        %731 = vrot.lane.b32.xlu0 %v478, 112
        %v732 = vpop.permute.xlu0 %731
        %v734 = vsel %vm485, %v727, 0
        %vm736 = vcmask 1043456
        %v738 = vsel %vm736, %v732, 0
        %740 = vmatprep.subr.bf16.mxu0 0
        %741 = vmatpush1.bf16.msra.mxu0 %v738
        %742 = vmatprep.subr.bf16.mxu0 0
        %743 = vmatpush1.bf16.msra.mxu0 0
        %744 = vmatprep.subr.bf16.mxu0 0
        %745 = vmatpush1.bf16.msra.mxu0 0
        %746 = vmatprep.subr.bf16.mxu0 0
        %747 = vmatpush1.bf16.msra.mxu0 0
        %748 = vmatprep.subr.bf16.mxu0 0
        %749 = vmatpush1.bf16.msra.mxu0 0
        %750 = vmatprep.subr.bf16.mxu0 0
        %751 = vmatpush1.bf16.msra.mxu0 0
        %752 = vmatprep.subr.bf16.mxu0 0
        %753 = vmatpush1.bf16.msra.mxu0 0
        %754 = vmatprep.subr.bf16.mxu0 0
        %755 = vmatpush1.bf16.msra.mxu0 0
        %756 = vmatprep.subr.bf16.mxu0 0
        %757 = vmatpush1.bf16.msra.mxu0 0
        %758 = vmatprep.subr.bf16.mxu0 0
        %759 = vmatpush1.bf16.msra.mxu0 0
        %760 = vmatprep.subr.bf16.mxu0 0
        %761 = vmatpush1.bf16.msra.mxu0 0
        %762 = vmatprep.subr.bf16.mxu0 0
        %763 = vmatpush1.bf16.msra.mxu0 0
        %764 = vmatprep.subr.bf16.mxu0 0
        %765 = vmatpush1.bf16.msra.mxu0 0
        %766 = vmatprep.subr.bf16.mxu0 0
        %767 = vmatpush1.bf16.msra.mxu0 0
        %768 = vmatprep.subr.bf16.mxu0 0
        %769 = vmatpush1.bf16.msra.mxu0 0
        %770 = vmatprep.subr.bf16.mxu0 0
        %771 = vmatpush1.bf16.msra.mxu0 0
        %772 = vmatprep.mubr.bf16.mxu0 0
        %773 = vmatmul.mubr.bf16.gmra.mrb[0].mxu0 %v734
        %v774 = vpop.f32.mrb[0].mxu0
        %v775 = vadd.f32 0.0, %v774
        %v776 = vpop.f32.mrb[0].mxu0
        %v777 = vpop.f32.mrb[0].mxu0
        %v778 = vpop.f32.mrb[0].mxu0
        %779 = vdwg.mxu0
        %780 = vrot.lane.b32.xlu0 %v479, 112
        %v781 = vpop.permute.xlu0 %780
        %v783 = vsel %vm485, %v728, 0
        %v786 = vsel %vm736, %v781, 0
        %788 = vmatprep.subr.bf16.mxu0 0
        %789 = vmatpush1.bf16.msra.mxu0 %v786
        %790 = vmatprep.subr.bf16.mxu0 0
        %791 = vmatpush1.bf16.msra.mxu0 0
        %792 = vmatprep.subr.bf16.mxu0 0
        %793 = vmatpush1.bf16.msra.mxu0 0
        %794 = vmatprep.subr.bf16.mxu0 0
        %795 = vmatpush1.bf16.msra.mxu0 0
        %796 = vmatprep.subr.bf16.mxu0 0
        %797 = vmatpush1.bf16.msra.mxu0 0
        %798 = vmatprep.subr.bf16.mxu0 0
        %799 = vmatpush1.bf16.msra.mxu0 0
        %800 = vmatprep.subr.bf16.mxu0 0
        %801 = vmatpush1.bf16.msra.mxu0 0
        %802 = vmatprep.subr.bf16.mxu0 0
        %803 = vmatpush1.bf16.msra.mxu0 0
        %804 = vmatprep.subr.bf16.mxu0 0
        %805 = vmatpush1.bf16.msra.mxu0 0
        %806 = vmatprep.subr.bf16.mxu0 0
        %807 = vmatpush1.bf16.msra.mxu0 0
        %808 = vmatprep.subr.bf16.mxu0 0
        %809 = vmatpush1.bf16.msra.mxu0 0
        %810 = vmatprep.subr.bf16.mxu0 0
        %811 = vmatpush1.bf16.msra.mxu0 0
        %812 = vmatprep.subr.bf16.mxu0 0
        %813 = vmatpush1.bf16.msra.mxu0 0
        %814 = vmatprep.subr.bf16.mxu0 0
        %815 = vmatpush1.bf16.msra.mxu0 0
        %816 = vmatprep.subr.bf16.mxu0 0
        %817 = vmatpush1.bf16.msra.mxu0 0
        %818 = vmatprep.subr.bf16.mxu0 0
        %819 = vmatpush1.bf16.msra.mxu0 0
        %820 = vmatprep.mubr.bf16.mxu0 0
        %821 = vmatmul.mubr.bf16.gmra.mrb[0].mxu0 %v783
        %v822 = vpop.f32.mrb[0].mxu0
        %v823 = vadd.f32 0.0, %v822
        %v824 = vpop.f32.mrb[0].mxu0
        %v825 = vpop.f32.mrb[0].mxu0
        %v826 = vpop.f32.mrb[0].mxu0
        %827 = vdwg.mxu0
        %828 = vrot.lane.b32.xlu0 %v480, 112
        %v829 = vpop.permute.xlu0 %828
        %v831 = vsel %vm485, %v729, 0
        %v834 = vsel %vm736, %v829, 0
        %836 = vmatprep.subr.bf16.mxu0 0
        %837 = vmatpush1.bf16.msra.mxu0 %v834
        %838 = vmatprep.subr.bf16.mxu0 0
        %839 = vmatpush1.bf16.msra.mxu0 0
        %840 = vmatprep.subr.bf16.mxu0 0
        %841 = vmatpush1.bf16.msra.mxu0 0
        %842 = vmatprep.subr.bf16.mxu0 0
        %843 = vmatpush1.bf16.msra.mxu0 0
        %844 = vmatprep.subr.bf16.mxu0 0
        %845 = vmatpush1.bf16.msra.mxu0 0
        %846 = vmatprep.subr.bf16.mxu0 0
        %847 = vmatpush1.bf16.msra.mxu0 0
        %848 = vmatprep.subr.bf16.mxu0 0
        %849 = vmatpush1.bf16.msra.mxu0 0
        %850 = vmatprep.subr.bf16.mxu0 0
        %851 = vmatpush1.bf16.msra.mxu0 0
        %852 = vmatprep.subr.bf16.mxu0 0
        %853 = vmatpush1.bf16.msra.mxu0 0
        %854 = vmatprep.subr.bf16.mxu0 0
        %855 = vmatpush1.bf16.msra.mxu0 0
        %856 = vmatprep.subr.bf16.mxu0 0
        %857 = vmatpush1.bf16.msra.mxu0 0
        %858 = vmatprep.subr.bf16.mxu0 0
        %859 = vmatpush1.bf16.msra.mxu0 0
        %860 = vmatprep.subr.bf16.mxu0 0
        %861 = vmatpush1.bf16.msra.mxu0 0
        %862 = vmatprep.subr.bf16.mxu0 0
        %863 = vmatpush1.bf16.msra.mxu0 0
        %864 = vmatprep.subr.bf16.mxu0 0
        %865 = vmatpush1.bf16.msra.mxu0 0
        %866 = vmatprep.subr.bf16.mxu0 0
        %867 = vmatpush1.bf16.msra.mxu0 0
        %868 = vmatprep.mubr.bf16.mxu0 0
        %869 = vmatmul.mubr.bf16.gmra.mrb[0].mxu0 %v831
        %v870 = vpop.f32.mrb[0].mxu0
        %v871 = vadd.f32 0.0, %v870
        %v872 = vpop.f32.mrb[0].mxu0
        %v873 = vpop.f32.mrb[0].mxu0
        %v874 = vpop.f32.mrb[0].mxu0
        %875 = vdwg.mxu0
        %876 = vrot.lane.b32.xlu0 %v481, 112
        %v877 = vpop.permute.xlu0 %876
        %v879 = vsel %vm485, %v730, 0
        %v882 = vsel %vm736, %v877, 0
        %884 = vmatprep.subr.bf16.mxu0 0
        %885 = vmatpush1.bf16.msra.mxu0 %v882
        %886 = vmatprep.subr.bf16.mxu0 0
        %887 = vmatpush1.bf16.msra.mxu0 0
        %888 = vmatprep.subr.bf16.mxu0 0
        %889 = vmatpush1.bf16.msra.mxu0 0
        %890 = vmatprep.subr.bf16.mxu0 0
        %891 = vmatpush1.bf16.msra.mxu0 0
        %892 = vmatprep.subr.bf16.mxu0 0
        %893 = vmatpush1.bf16.msra.mxu0 0
        %894 = vmatprep.subr.bf16.mxu0 0
        %895 = vmatpush1.bf16.msra.mxu0 0
        %896 = vmatprep.subr.bf16.mxu0 0
        %897 = vmatpush1.bf16.msra.mxu0 0
        %898 = vmatprep.subr.bf16.mxu0 0
        %899 = vmatpush1.bf16.msra.mxu0 0
        %900 = vmatprep.subr.bf16.mxu0 0
        %901 = vmatpush1.bf16.msra.mxu0 0
        %902 = vmatprep.subr.bf16.mxu0 0
        %903 = vmatpush1.bf16.msra.mxu0 0
        %904 = vmatprep.subr.bf16.mxu0 0
        %905 = vmatpush1.bf16.msra.mxu0 0
        %906 = vmatprep.subr.bf16.mxu0 0
        %907 = vmatpush1.bf16.msra.mxu0 0
        %908 = vmatprep.subr.bf16.mxu0 0
        %909 = vmatpush1.bf16.msra.mxu0 0
        %910 = vmatprep.subr.bf16.mxu0 0
        %911 = vmatpush1.bf16.msra.mxu0 0
        %912 = vmatprep.subr.bf16.mxu0 0
        %913 = vmatpush1.bf16.msra.mxu0 0
        %914 = vmatprep.subr.bf16.mxu0 0
        %915 = vmatpush1.bf16.msra.mxu0 0
        %916 = vmatprep.mubr.bf16.mxu0 0
        %917 = vmatmul.mubr.bf16.gmra.mrb[0].mxu0 %v879
        %v918 = vpop.f32.mrb[0].mxu0
        %v919 = vadd.f32 0.0, %v918
        %v920 = vpop.f32.mrb[0].mxu0
        %v921 = vpop.f32.mrb[0].mxu0
        %v922 = vpop.f32.mrb[0].mxu0
        %923 = vdwg.mxu0
        %v924 = vpack.c.bf16 %v775, %v775
        %v925 = vpack.c.bf16 %v823, %v823
        %v926 = vpack.c.bf16 %v871, %v871
        %v927 = vpack.c.bf16 %v919, %v919
        %v928 = vld [vmem:[%s2] sm:$0xf]
        %v929 = vld [vmem:[%s2 + $0x4] sm:$0xf]
        %v930 = vld [vmem:[%s2 + $0x8] sm:$0xf]
        %v931 = vld [vmem:[%s2 + $0xc] sm:$0xf]
        %v933 = vsel %vm485, %v924, 0
        %v936 = vsel %vm736, %v928, 0
        %938 = vmatprep.subr.bf16.mxu0 0
        %939 = vmatpush1.bf16.msra.mxu0 %v936
        %940 = vmatprep.subr.bf16.mxu0 0
        %941 = vmatpush1.bf16.msra.mxu0 0
        %942 = vmatprep.subr.bf16.mxu0 0
        %943 = vmatpush1.bf16.msra.mxu0 0
        %944 = vmatprep.subr.bf16.mxu0 0
        %945 = vmatpush1.bf16.msra.mxu0 0
        %946 = vmatprep.subr.bf16.mxu0 0
        %947 = vmatpush1.bf16.msra.mxu0 0
        %948 = vmatprep.subr.bf16.mxu0 0
        %949 = vmatpush1.bf16.msra.mxu0 0
        %950 = vmatprep.subr.bf16.mxu0 0
        %951 = vmatpush1.bf16.msra.mxu0 0
        %952 = vmatprep.subr.bf16.mxu0 0
        %953 = vmatpush1.bf16.msra.mxu0 0
        %954 = vmatprep.subr.bf16.mxu0 0
        %955 = vmatpush1.bf16.msra.mxu0 0
        %956 = vmatprep.subr.bf16.mxu0 0
        %957 = vmatpush1.bf16.msra.mxu0 0
        %958 = vmatprep.subr.bf16.mxu0 0
        %959 = vmatpush1.bf16.msra.mxu0 0
        %960 = vmatprep.subr.bf16.mxu0 0
        %961 = vmatpush1.bf16.msra.mxu0 0
        %962 = vmatprep.subr.bf16.mxu0 0
        %963 = vmatpush1.bf16.msra.mxu0 0
        %964 = vmatprep.subr.bf16.mxu0 0
        %965 = vmatpush1.bf16.msra.mxu0 0
        %966 = vmatprep.subr.bf16.mxu0 0
        %967 = vmatpush1.bf16.msra.mxu0 0
        %968 = vmatprep.subr.bf16.mxu0 0
        %969 = vmatpush1.bf16.msra.mxu0 0
        %970 = vmatprep.mubr.bf16.mxu0 0
        %971 = vmatmul.mubr.bf16.gmra.mrb[0].mxu0 %v933
        %v972 = vpop.f32.mrb[0].mxu0
        %v973 = vadd.f32 0.0, %v972
        %v974 = vpop.f32.mrb[0].mxu0
        %v975 = vpop.f32.mrb[0].mxu0
        %v976 = vpop.f32.mrb[0].mxu0
        %977 = vdwg.mxu0
        %v979 = vsel %vm485, %v925, 0
        %v982 = vsel %vm736, %v929, 0
        %984 = vmatprep.subr.bf16.mxu0 0
        %985 = vmatpush1.bf16.msra.mxu0 %v982
        %986 = vmatprep.subr.bf16.mxu0 0
        %987 = vmatpush1.bf16.msra.mxu0 0
        %988 = vmatprep.subr.bf16.mxu0 0
        %989 = vmatpush1.bf16.msra.mxu0 0
        %990 = vmatprep.subr.bf16.mxu0 0
        %991 = vmatpush1.bf16.msra.mxu0 0
        %992 = vmatprep.subr.bf16.mxu0 0
        %993 = vmatpush1.bf16.msra.mxu0 0
        %994 = vmatprep.subr.bf16.mxu0 0
        %995 = vmatpush1.bf16.msra.mxu0 0
        %996 = vmatprep.subr.bf16.mxu0 0
        %997 = vmatpush1.bf16.msra.mxu0 0
        %998 = vmatprep.subr.bf16.mxu0 0
        %999 = vmatpush1.bf16.msra.mxu0 0
        %1000 = vmatprep.subr.bf16.mxu0 0
        %1001 = vmatpush1.bf16.msra.mxu0 0
        %1002 = vmatprep.subr.bf16.mxu0 0
        %1003 = vmatpush1.bf16.msra.mxu0 0
        %1004 = vmatprep.subr.bf16.mxu0 0
        %1005 = vmatpush1.bf16.msra.mxu0 0
        %1006 = vmatprep.subr.bf16.mxu0 0
        %1007 = vmatpush1.bf16.msra.mxu0 0
        %1008 = vmatprep.subr.bf16.mxu0 0
        %1009 = vmatpush1.bf16.msra.mxu0 0
        %1010 = vmatprep.subr.bf16.mxu0 0
        %1011 = vmatpush1.bf16.msra.mxu0 0
        %1012 = vmatprep.subr.bf16.mxu0 0
        %1013 = vmatpush1.bf16.msra.mxu0 0
        %1014 = vmatprep.subr.bf16.mxu0 0
        %1015 = vmatpush1.bf16.msra.mxu0 0
        %1016 = vmatprep.mubr.bf16.mxu0 0
        %1017 = vmatmul.mubr.bf16.gmra.mrb[0].mxu0 %v979
        %v1018 = vpop.f32.mrb[0].mxu0
        %v1019 = vadd.f32 0.0, %v1018
        %v1020 = vpop.f32.mrb[0].mxu0
        %v1021 = vpop.f32.mrb[0].mxu0
        %v1022 = vpop.f32.mrb[0].mxu0
        %1023 = vdwg.mxu0
        %v1025 = vsel %vm485, %v926, 0
        %v1028 = vsel %vm736, %v930, 0
        %1030 = vmatprep.subr.bf16.mxu0 0
        %1031 = vmatpush1.bf16.msra.mxu0 %v1028
        %1032 = vmatprep.subr.bf16.mxu0 0
        %1033 = vmatpush1.bf16.msra.mxu0 0
        %1034 = vmatprep.subr.bf16.mxu0 0
        %1035 = vmatpush1.bf16.msra.mxu0 0
        %1036 = vmatprep.subr.bf16.mxu0 0
        %1037 = vmatpush1.bf16.msra.mxu0 0
        %1038 = vmatprep.subr.bf16.mxu0 0
        %1039 = vmatpush1.bf16.msra.mxu0 0
        %1040 = vmatprep.subr.bf16.mxu0 0
        %1041 = vmatpush1.bf16.msra.mxu0 0
        %1042 = vmatprep.subr.bf16.mxu0 0
        %1043 = vmatpush1.bf16.msra.mxu0 0
        %1044 = vmatprep.subr.bf16.mxu0 0
        %1045 = vmatpush1.bf16.msra.mxu0 0
        %1046 = vmatprep.subr.bf16.mxu0 0
        %1047 = vmatpush1.bf16.msra.mxu0 0
        %1048 = vmatprep.subr.bf16.mxu0 0
        %1049 = vmatpush1.bf16.msra.mxu0 0
        %1050 = vmatprep.subr.bf16.mxu0 0
        %1051 = vmatpush1.bf16.msra.mxu0 0
        %1052 = vmatprep.subr.bf16.mxu0 0
        %1053 = vmatpush1.bf16.msra.mxu0 0
        %1054 = vmatprep.subr.bf16.mxu0 0
        %1055 = vmatpush1.bf16.msra.mxu0 0
        %1056 = vmatprep.subr.bf16.mxu0 0
        %1057 = vmatpush1.bf16.msra.mxu0 0
        %1058 = vmatprep.subr.bf16.mxu0 0
        %1059 = vmatpush1.bf16.msra.mxu0 0
        %1060 = vmatprep.subr.bf16.mxu0 0
        %1061 = vmatpush1.bf16.msra.mxu0 0
        %1062 = vmatprep.mubr.bf16.mxu0 0
        %1063 = vmatmul.mubr.bf16.gmra.mrb[0].mxu0 %v1025
        %v1064 = vpop.f32.mrb[0].mxu0
        %v1065 = vadd.f32 0.0, %v1064
        %v1066 = vpop.f32.mrb[0].mxu0
        %v1067 = vpop.f32.mrb[0].mxu0
        %v1068 = vpop.f32.mrb[0].mxu0
        %1069 = vdwg.mxu0
        %v1071 = vsel %vm485, %v927, 0
        %v1074 = vsel %vm736, %v931, 0
        %1076 = vmatprep.subr.bf16.mxu0 0
        %1077 = vmatpush1.bf16.msra.mxu0 %v1074
        %1078 = vmatprep.subr.bf16.mxu0 0
        %1079 = vmatpush1.bf16.msra.mxu0 0
        %1080 = vmatprep.subr.bf16.mxu0 0
        %1081 = vmatpush1.bf16.msra.mxu0 0
        %1082 = vmatprep.subr.bf16.mxu0 0
        %1083 = vmatpush1.bf16.msra.mxu0 0
        %1084 = vmatprep.subr.bf16.mxu0 0
        %1085 = vmatpush1.bf16.msra.mxu0 0
        %1086 = vmatprep.subr.bf16.mxu0 0
        %1087 = vmatpush1.bf16.msra.mxu0 0
        %1088 = vmatprep.subr.bf16.mxu0 0
        %1089 = vmatpush1.bf16.msra.mxu0 0
        %1090 = vmatprep.subr.bf16.mxu0 0
        %1091 = vmatpush1.bf16.msra.mxu0 0
        %1092 = vmatprep.subr.bf16.mxu0 0
        %1093 = vmatpush1.bf16.msra.mxu0 0
        %1094 = vmatprep.subr.bf16.mxu0 0
        %1095 = vmatpush1.bf16.msra.mxu0 0
        %1096 = vmatprep.subr.bf16.mxu0 0
        %1097 = vmatpush1.bf16.msra.mxu0 0
        %1098 = vmatprep.subr.bf16.mxu0 0
        %1099 = vmatpush1.bf16.msra.mxu0 0
        %1100 = vmatprep.subr.bf16.mxu0 0
        %1101 = vmatpush1.bf16.msra.mxu0 0
        %1102 = vmatprep.subr.bf16.mxu0 0
        %1103 = vmatpush1.bf16.msra.mxu0 0
        %1104 = vmatprep.subr.bf16.mxu0 0
        %1105 = vmatpush1.bf16.msra.mxu0 0
        %1106 = vmatprep.subr.bf16.mxu0 0
        %1107 = vmatpush1.bf16.msra.mxu0 0
        %1108 = vmatprep.mubr.bf16.mxu0 0
        %1109 = vmatmul.mubr.bf16.gmra.mrb[0].mxu0 %v1071
        %v1110 = vpop.f32.mrb[0].mxu0
        %v1111 = vadd.f32 0.0, %v1110
        %v1112 = vpop.f32.mrb[0].mxu0
        %v1113 = vpop.f32.mrb[0].mxu0
        %v1114 = vpop.f32.mrb[0].mxu0
        %1115 = vdwg.mxu0
        %v1116 = vsel %vm278, %v973, 0.0
        %v1117 = vsel %vm278, %v1019, 0.0
        %v1118 = vadd.f32 %v1116, %v1117
        %v1119 = vsel %vm278, %v1065, 0.0
        %v1120 = vadd.f32 %v1118, %v1119
        %v1121 = vsel %vm278, %v1111, 0.0
        %v1122 = vadd.f32 %v1120, %v1121
        %v1123 = vld [vmem:[%s4] sm:$0x1]
        %v1125 = vlaneseq
        %v1126 = vshrl.u32 %v1125, 7
        %v1127 = vsub.s32 0, %v1126
        %v1128 = vrot.slane %v1123, %v1127
        %v1130 = vadd.f32 %v1122, %v1128
        %1131 = vst.msk [vmem:[%s215] sm:$0xff] %vm278, %v1130
        %s1132 = sand.u32 %s137, 1
        %s1133 = scalar_lea.sflag [#allocation3], %s1132
        %s1134 = sand.u32 %s137, 1
        %s1135 = smul.addr %s1134, 8
        %s1136 = scalar_lea.vmem [#allocation2], %s1135
        // Predicated region
        $region41: #{tpu_custom_call.1} parent=39 // pred_check
          %p1137 = pneg %p147
        $region42: #{tpu_custom_call.1} parent=39 // pred_check_branch
          %1139 = sbr.rel (%p1137) target = $region44
        $region43: #{tpu_custom_call.1} parent=39 // pred_region
          %s1141 = ssub.s32 128, 128
          %1142 = vsyncadd %s1133, %s1141
          %s1143 = smul.addr %s19, 128
          %s1144 = scalar_lea.hbm %s5, %s1143
          %s1146 = sshll.u32 %s1136, 4
          %s1147 = int_to_ptr.vmem [resolvable:$true] %s1146
          %1149 = dma.vmem_to_hbm [thread:$0]  %s1147, 128, %s1144, %s1133
        $region44: #{tpu_custom_call.1} parent=39 // pred_fallthru
          _
      $region40: #{tpu_custom_call.1} parent=5 // pred_fallthru
        _
      %p1150 = scmp.le.s32.totalorder 2, %s14
      // Predicated region
      $region45: #{tpu_custom_call.1} parent=5 // pred_check
        %p1151 = pneg %p1150
      $region46: #{tpu_custom_call.1} parent=5 // pred_check_branch
        %1153 = sbr.rel (%p1151) target = $region48
      $region47: #{tpu_custom_call.1} parent=5 // pred_region
        %s1154 = ssub.s32 %s14, 2
        // Predicated region
        $region49: #{tpu_custom_call.1} parent=47 // pred_check
          %p1155 = pneg %p153
        $region50: #{tpu_custom_call.1} parent=47 // pred_check_branch
          %1157 = sbr.rel (%p1155) target = $region52
        $region51: #{tpu_custom_call.1} parent=47 // pred_region
          %s1158 = sand.u32 %s138, 1
          %s1159 = scalar_lea.sflag [#allocation3], %s1158
          %s1160 = sand.u32 %s138, 1
          %s1161 = smul.addr %s1160, 8
          %s1162 = scalar_lea.vmem [#allocation2], %s1161
          %1163 = dma.done %s1159, 128
        $region52: #{tpu_custom_call.1} parent=47 // pred_fallthru
          _
      $region48: #{tpu_custom_call.1} parent=5 // pred_fallthru
        _
    $region6: #{tpu_custom_call.1} parent=1 // loop_footer
      %s18 = sadd.s32 1, %s14
    $region7: #{tpu_custom_call.1} parent=1 // loop_footer_branch
      %13 = sbr.rel target = $region3
    $region8: #{tpu_custom_call.1} parent=1 // loop_exit
      _
    %1164 = vsyncpa [#allocation3], 1
    %s1165 = scalar_lea.sflag [#allocation3], 1
    %1166 = vsyncpa %s1165, 1

</llo_original>
